<compile_context>
chip_gen: v5e
topology: v5e:2x2
jax: 0.10.0
libtpu: 0.0.40
codegen_flags: <defaults>
</compile_context>

<pallas_src>
import jax
import jax.numpy as jnp
import numpy as np
from jax import lax
from jax.experimental import pallas as pl
from jax.experimental.pallas import tpu as pltpu

H = W = 20                 # Linear(6400, 512) implies 16 * 20 * 20 features
NPIX = H * W               # 400 input pixels per sample
K_PAD = 512                # input pixels zero-padded to a lane-friendly width
HID1 = 512
HID2 = 128
N_CLASS = 2
OUT_PAD = 128              # lane-dense logits tile
NEG_SLOPE = 0.01           # nn.LeakyReLU default
BN_EPS = 1e-5              # nn.BatchNorm default eps


# ------------------------------ Pallas kernel --------------------------------

def fused_kernel(x_ref, wA_ref, bA_ref, wB_ref, bB_ref, wC_ref, bC_ref, out_ref):
    """Whole network for one batch tile (everything affine before the first
    LeakyReLU is pre-folded into wA/bA).

    x_ref : (TB, 512)  bf16   flattened 20x20 image, zero-padded to 512 lanes
    wA_ref: (512, 512) bf16   conv1+BN1+conv2+BN2+flatten+fc1+BN1d folded
    bA_ref: (1, 512)   f32    folded bias
    wB_ref: (512, 128) bf16   Linear(512,128) + BN1d(128) folded
    bB_ref: (1, 128)   f32
    wC_ref: (128, 128) bf16   Linear(128,2) padded to 128 output lanes
    bC_ref: (1, 128)   f32
    out_ref:(TB, 128)  f32    log_softmax logits (cols >= 2 are padding)
    """
    # fc-prefix (folded): Dropout(0.2)=id, LeakyReLU
    h1 = jnp.dot(x_ref[...], wA_ref[...],
                 preferred_element_type=jnp.float32) + bA_ref[...]
    h1 = jnp.maximum(h1, NEG_SLOPE * h1)

    # Linear(512,128) + Dropout(0.5)=id + BN1d(128) folded, LeakyReLU
    h2 = jnp.dot(h1.astype(jnp.bfloat16), wB_ref[...],
                 preferred_element_type=jnp.float32) + bB_ref[...]
    h2 = jnp.maximum(h2, NEG_SLOPE * h2)

    # Linear(128,2) (padded to 128 lanes for dense stores)
    logits = jnp.dot(h2.astype(jnp.bfloat16), wC_ref[...],
                     preferred_element_type=jnp.float32) + bC_ref[...]

    # log_softmax over the 2 real classes; columns >= 2 exist only for a
    # lane-dense 128-wide store and are sliced off by the wrapper.
    col = lax.broadcasted_iota(jnp.int32, logits.shape, 1)
    valid = col < N_CLASS
    neg = jnp.float32(-1e30)
    m = jnp.max(jnp.where(valid, logits, neg), axis=1, keepdims=True)
    se = jnp.sum(jnp.where(valid, jnp.exp(logits - m), 0.0), axis=1, keepdims=True)
    out_ref[...] = logits - m - jnp.log(se)


# ------------------------------ wrapper --------------------------------------

def _choose_tile(n):
    """Batch-tile rows: multiple of 16 (bf16 sublane packing), >= 2 grid steps
    when the batch allows it (v7x megacore split), capped at 256 (256-wide
    v6e/v7x MXU fill, per-step overhead amortization)."""
    if n <= 16:
        return 16
    half = -(-n // 2)                # ceil(n / 2) -> at least two grid steps
    tb = -(-half // 16) * 16         # round up to a multiple of 16
    return min(tb, 256)


def eleva_forward(x, kp):
    """x: (N, 1, 20, 20) f32 NCHW, same as the PyTorch module. Returns (N, 2)."""
    n = x.shape[0]
    tb = _choose_tile(n)
    n_pad = ((n + tb - 1) // tb) * tb

    # Tiny glue: flatten the image and zero-pad rows/lanes; bf16 activation
    # stream (MXU consumes bf16 anyway; halves the HBM read).
    xf = x.reshape(n, NPIX).astype(jnp.bfloat16)
    xw = jnp.pad(xf, ((0, n_pad - n), (0, K_PAD - NPIX)))        # (n_pad, 512)

    out = pl.pallas_call(
        fused_kernel,
        out_shape=jax.ShapeDtypeStruct((n_pad, OUT_PAD), jnp.float32),
        grid=(n_pad // tb,),
        in_specs=[
            pl.BlockSpec((tb, K_PAD), lambda i: (i, 0)),          # batch-tiled input
            pl.BlockSpec((K_PAD, HID1), lambda i: (0, 0)),        # VMEM-resident weights
            pl.BlockSpec((1, HID1), lambda i: (0, 0)),
            pl.BlockSpec((HID1, HID2), lambda i: (0, 0)),
            pl.BlockSpec((1, HID2), lambda i: (0, 0)),
            pl.BlockSpec((HID2, OUT_PAD), lambda i: (0, 0)),
            pl.BlockSpec((1, OUT_PAD), lambda i: (0, 0)),
        ],
        out_specs=pl.BlockSpec((tb, OUT_PAD), lambda i: (i, 0)),
        compiler_params=pltpu.CompilerParams(
            dimension_semantics=("parallel",),
            vmem_limit_bytes=16 * 1024 * 1024),
    )(xw, kp['wA'], kp['bA'], kp['wB'], kp['bB'], kp['wC'], kp['bC'])

    return out[:n, :N_CLASS]


# ------------------------ parameter folding (init time) ----------------------

def _bn_eval(key, c):
    k1, k2, k3, k4 = jax.random.split(key, 4)
    gamma = 1.0 + 0.1 * jax.random.normal(k1, (c,), jnp.float32)
    beta = 0.1 * jax.random.normal(k2, (c,), jnp.float32)
    mean = 0.1 * jax.random.normal(k3, (c,), jnp.float32)
    var = 1.0 + 0.1 * jnp.abs(jax.random.normal(k4, (c,), jnp.float32))
    scale = gamma / jnp.sqrt(var + BN_EPS)
    shift = beta - mean * scale
    return scale, shift


def init_raw_params(key):
    ks = jax.random.split(key, 14)
    p = {}
    p['w1'] = 0.2 * jax.random.normal(ks[0], (8, 1, 3, 3), jnp.float32)
    p['b1'] = 0.1 * jax.random.normal(ks[1], (8,), jnp.float32)
    p['s1'], p['t1'] = _bn_eval(ks[2], 8)
    p['w2'] = 0.08 * jax.random.normal(ks[3], (16, 8, 5, 5), jnp.float32)
    p['b2'] = 0.1 * jax.random.normal(ks[4], (16,), jnp.float32)
    p['s2'], p['t2'] = _bn_eval(ks[5], 16)
    p['w3'] = (1.0 / np.sqrt(6400)) * jax.random.normal(ks[6], (512, 6400), jnp.float32)
    p['b3'] = 0.1 * jax.random.normal(ks[7], (512,), jnp.float32)
    p['s3'], p['t3'] = _bn_eval(ks[8], 512)
    p['w4'] = (1.0 / np.sqrt(512)) * jax.random.normal(ks[9], (128, 512), jnp.float32)
    p['b4'] = 0.1 * jax.random.normal(ks[10], (128,), jnp.float32)
    p['s4'], p['t4'] = _bn_eval(ks[11], 128)
    p['w5'] = (1.0 / np.sqrt(128)) * jax.random.normal(ks[12], (2, 128), jnp.float32)
    p['b5'] = 0.1 * jax.random.normal(ks[13], (2,), jnp.float32)
    return p


def _affine_prefix(xi, rp):
    """conv1 -> BN1 -> conv2 -> BN2 -> flatten -> fc1 -> BN1d in f32 (eval mode).
    Affine in xi, so it defines the folded weight/bias exactly."""
    dn = ('NCHW', 'OIHW', 'NCHW')
    hp = lax.Precision.HIGHEST
    y = lax.conv_general_dilated(xi, rp['w1'], (1, 1), [(1, 1), (1, 1)],
                                 dimension_numbers=dn, precision=hp)
    y = y + rp['b1'][None, :, None, None]
    y = y * rp['s1'][None, :, None, None] + rp['t1'][None, :, None, None]
    y = lax.conv_general_dilated(y, rp['w2'], (1, 1), [(2, 2), (2, 2)],
                                 dimension_numbers=dn, precision=hp)
    y = y + rp['b2'][None, :, None, None]
    y = y * rp['s2'][None, :, None, None] + rp['t2'][None, :, None, None]
    f = y.reshape(y.shape[0], -1)                       # NCHW flatten == torch Flatten
    h = jnp.dot(f, rp['w3'].T, precision=hp) + rp['b3']
    return h * rp['s3'] + rp['t3']                      # (B, 512)


def fold_params(rp):
    """Fold Dropout (identity), all eval-mode BatchNorms, both conv layers, the
    conv zero-padding, the NCHW flatten and Linear(6400,512) into a single
    (512, 512) matrix by evaluating the affine prefix on the pixel basis."""
    f32 = jnp.float32

    basis = jnp.eye(NPIX, dtype=f32).reshape(NPIX, 1, H, W)       # one-hot pixels
    zero = jnp.zeros((1, 1, H, W), f32)
    h_all = _affine_prefix(jnp.concatenate([zero, basis], axis=0), rp)
    bA = h_all[0]                                                  # (512,) prefix bias
    wA = h_all[1:] - bA[None, :]                                   # (400, 512) exact fold
    wA_pad = jnp.zeros((K_PAD, HID1), f32).at[:NPIX].set(wA)       # pad K to 512 lanes

    # Linear(512,128) + BN1d(128)
    wB = (rp['w4'] * rp['s4'][:, None]).T                          # (512, 128)
    bB = rp['s4'] * rp['b4'] + rp['t4']

    # Linear(128,2) padded to 128 output lanes for dense stores.
    wC = jnp.zeros((HID2, OUT_PAD), f32).at[:, :N_CLASS].set(rp['w5'].T)
    bC = jnp.zeros((OUT_PAD,), f32).at[:N_CLASS].set(rp['b5'])

    return dict(
        wA=wA_pad.astype(jnp.bfloat16),
        bA=bA.reshape(1, HID1).astype(f32),
        wB=wB.astype(jnp.bfloat16),
        bB=bB.reshape(1, HID2).astype(f32),
        wC=wC.astype(jnp.bfloat16),
        bC=bC.reshape(1, OUT_PAD).astype(f32),
    )


# ---------------------- pure-JAX reference (original structure) --------------

def reference_forward(x, rp):
    hp = lax.Precision.HIGHEST
    h = _affine_prefix(x, rp)
    h = jnp.where(h >= 0.0, h, NEG_SLOPE * h)
    h = jnp.dot(h, rp['w4'].T, precision=hp) + rp['b4']
    h = h * rp['s4'] + rp['t4']
    h = jnp.where(h >= 0.0, h, NEG_SLOPE * h)
    logits = jnp.dot(h, rp['w5'].T, precision=hp) + rp['b5']
    return jax.nn.log_softmax(logits, axis=1)


if __name__ == "__main__":
    key = jax.random.PRNGKey(0)
    k_x, k_p = jax.random.split(key)
    raw = init_raw_params(k_p)
    kp = fold_params(raw)

    fwd = jax.jit(eleva_forward)
    ref = jax.jit(reference_forward)

    # N=2: single grid step.  N=40: multi-step grid + padded batch rows.
    for N in (2, 40):
        x = jax.random.normal(jax.random.fold_in(k_x, N), (N, 1, H, W), jnp.float32)
        out = jax.block_until_ready(fwd(x, kp))
        assert out.shape == (N, N_CLASS) and out.dtype == jnp.float32
        assert bool(jnp.all(jnp.isfinite(out)))
        # Tolerance reflects bf16 weight/activation storage at the MXU inputs
        # (f32 accumulation); the reference runs the original layer stack in f32.
        r = jax.block_until_ready(ref(x, raw))
        np.testing.assert_allclose(np.asarray(out), np.asarray(r),
                                   rtol=3e-2, atol=3e-2)
        np.testing.assert_allclose(np.exp(np.asarray(out)).sum(axis=1), 1.0,
                                   atol=1e-3)
    print("KERNEL_OK")
</pallas_src>

<mosaic_0001>
module attributes {stable_mosaic.version = 11 : i64} {
  func.func @fused_kernel(%arg0: i32, %arg1: memref<16x512xbf16, #tpu.memory_space<vmem>>, %arg2: memref<512x512xbf16, #tpu.memory_space<vmem>>, %arg3: memref<1x512xf32, #tpu.memory_space<vmem>>, %arg4: memref<512x128xbf16, #tpu.memory_space<vmem>>, %arg5: memref<1x128xf32, #tpu.memory_space<vmem>>, %arg6: memref<128x128xbf16, #tpu.memory_space<vmem>>, %arg7: memref<1x128xf32, #tpu.memory_space<vmem>>, %arg8: memref<16x128xf32, #tpu.memory_space<vmem>>) attributes {dimension_semantics = [#tpu.dimension_semantics<parallel>], iteration_bounds = array<i64: 1>, scalar_prefetch = 0 : i64, scratch_operands = 0 : i64, tpu.core_type = #tpu.core_type<tc>, window_params = [{transform_indices = @transform_0, window_bounds = array<i64: 16, 512>}, {pipeline_mode = #tpu.pipeline_mode<synchronous>, transform_indices = @transform_1, window_bounds = array<i64: 512, 512>}, {pipeline_mode = #tpu.pipeline_mode<synchronous>, transform_indices = @transform_2, window_bounds = array<i64: 1, 512>}, {pipeline_mode = #tpu.pipeline_mode<synchronous>, transform_indices = @transform_3, window_bounds = array<i64: 512, 128>}, {pipeline_mode = #tpu.pipeline_mode<synchronous>, transform_indices = @transform_4, window_bounds = array<i64: 1, 128>}, {pipeline_mode = #tpu.pipeline_mode<synchronous>, transform_indices = @transform_5, window_bounds = array<i64: 128, 128>}, {pipeline_mode = #tpu.pipeline_mode<synchronous>, transform_indices = @transform_6, window_bounds = array<i64: 1, 128>}, {transform_indices = @transform_7, window_bounds = array<i64: 16, 128>}]} {
    %c0 = arith.constant 0 : index
    %c0_0 = arith.constant 0 : index
    %0 = vector.load %arg1[%c0, %c0_0] : memref<16x512xbf16, #tpu.memory_space<vmem>>, vector<16x512xbf16>
    %c0_1 = arith.constant 0 : index
    %c0_2 = arith.constant 0 : index
    %1 = vector.load %arg2[%c0_1, %c0_2] : memref<512x512xbf16, #tpu.memory_space<vmem>>, vector<512x512xbf16>
    %cst = arith.constant dense<0.000000e+00> : vector<16x512xf32>
    %2 = tpu.matmul %0, %1, %cst {dimension_numbers = #tpu.dot_dimension_numbers<[1], [0], [0], [1], [0, 0, 1, 1], [], []>} : vector<16x512xbf16>, vector<512x512xbf16>, vector<16x512xf32> -> vector<16x512xf32>
    %c0_3 = arith.constant 0 : index
    %c0_4 = arith.constant 0 : index
    %3 = vector.load %arg3[%c0_3, %c0_4] : memref<1x512xf32, #tpu.memory_space<vmem>>, vector<1x512xf32>
    %4 = vector.broadcast %3 : vector<1x512xf32> to vector<16x512xf32>
    %5 = arith.addf %2, %4 : vector<16x512xf32>
    %cst_5 = arith.constant 0.00999999977 : f32
    %6 = vector.broadcast %cst_5 : f32 to vector<16x512xf32>
    %7 = arith.mulf %6, %5 : vector<16x512xf32>
    %8 = arith.maximumf %5, %7 : vector<16x512xf32>
    %9 = arith.truncf %8 : vector<16x512xf32> to vector<16x512xbf16>
    %c0_6 = arith.constant 0 : index
    %c0_7 = arith.constant 0 : index
    %10 = vector.load %arg4[%c0_6, %c0_7] : memref<512x128xbf16, #tpu.memory_space<vmem>>, vector<512x128xbf16>
    %cst_8 = arith.constant dense<0.000000e+00> : vector<16x128xf32>
    %11 = tpu.matmul %9, %10, %cst_8 {dimension_numbers = #tpu.dot_dimension_numbers<[1], [0], [0], [1], [0, 0, 1, 1], [], []>} : vector<16x512xbf16>, vector<512x128xbf16>, vector<16x128xf32> -> vector<16x128xf32>
    %c0_9 = arith.constant 0 : index
    %c0_10 = arith.constant 0 : index
    %12 = vector.load %arg5[%c0_9, %c0_10] : memref<1x128xf32, #tpu.memory_space<vmem>>, vector<1x128xf32>
    %13 = vector.broadcast %12 : vector<1x128xf32> to vector<16x128xf32>
    %14 = arith.addf %11, %13 : vector<16x128xf32>
    %cst_11 = arith.constant 0.00999999977 : f32
    %15 = vector.broadcast %cst_11 : f32 to vector<16x128xf32>
    %16 = arith.mulf %15, %14 : vector<16x128xf32>
    %17 = arith.maximumf %14, %16 : vector<16x128xf32>
    %18 = arith.truncf %17 : vector<16x128xf32> to vector<16x128xbf16>
    %c0_12 = arith.constant 0 : index
    %c0_13 = arith.constant 0 : index
    %19 = vector.load %arg6[%c0_12, %c0_13] : memref<128x128xbf16, #tpu.memory_space<vmem>>, vector<128x128xbf16>
    %cst_14 = arith.constant dense<0.000000e+00> : vector<16x128xf32>
    %20 = tpu.matmul %18, %19, %cst_14 {dimension_numbers = #tpu.dot_dimension_numbers<[1], [0], [0], [1], [0, 0, 1, 1], [], []>} : vector<16x128xbf16>, vector<128x128xbf16>, vector<16x128xf32> -> vector<16x128xf32>
    %c0_15 = arith.constant 0 : index
    %c0_16 = arith.constant 0 : index
    %21 = vector.load %arg7[%c0_15, %c0_16] : memref<1x128xf32, #tpu.memory_space<vmem>>, vector<1x128xf32>
    %22 = vector.broadcast %21 : vector<1x128xf32> to vector<16x128xf32>
    %23 = arith.addf %20, %22 : vector<16x128xf32>
    %24 = tpu.iota {dimensions = array<i32: 1>} : vector<16x128xi32>
    %c2_i32 = arith.constant 2 : i32
    %25 = vector.broadcast %c2_i32 : i32 to vector<16x128xi32>
    %26 = arith.cmpi slt, %24, %25 : vector<16x128xi32>
    %cst_17 = arith.constant -1.000000e+30 : f32
    %27 = vector.broadcast %cst_17 : f32 to vector<16x128xf32>
    %28 = arith.select %26, %23, %27 : vector<16x128xi1>, vector<16x128xf32>
    %cst_18 = arith.constant dense<0xFF800000> : vector<16xf32>
    %29 = vector.multi_reduction <maximumf>, %28, %cst_18 [1] : vector<16x128xf32> to vector<16xf32>
    %30 = vector.shape_cast %29 : vector<16xf32> to vector<16x1xf32>
    %31 = vector.broadcast %30 : vector<16x1xf32> to vector<16x128xf32>
    %32 = arith.subf %23, %31 : vector<16x128xf32>
    %33 = math.exp %32 : vector<16x128xf32>
    %cst_19 = arith.constant 0.000000e+00 : f32
    %34 = vector.broadcast %cst_19 : f32 to vector<16x128xf32>
    %35 = arith.select %26, %33, %34 : vector<16x128xi1>, vector<16x128xf32>
    %cst_20 = arith.constant dense<0.000000e+00> : vector<16xf32>
    %36 = vector.multi_reduction <add>, %35, %cst_20 [1] : vector<16x128xf32> to vector<16xf32>
    %37 = vector.shape_cast %36 : vector<16xf32> to vector<16x1xf32>
    %38 = vector.broadcast %30 : vector<16x1xf32> to vector<16x128xf32>
    %39 = arith.subf %23, %38 : vector<16x128xf32>
    %40 = math.log %37 : vector<16x1xf32>
    %41 = vector.broadcast %40 : vector<16x1xf32> to vector<16x128xf32>
    %42 = arith.subf %39, %41 : vector<16x128xf32>
    %c0_21 = arith.constant 0 : index
    %c0_22 = arith.constant 0 : index
    %43 = vector.load %arg8[%c0_21, %c0_22] : memref<16x128xf32, #tpu.memory_space<vmem>>, vector<16x128xf32>
    tpu.vector_store %arg8[%c0_21, %c0_22], %42 {strides = array<i32>} : memref<16x128xf32, #tpu.memory_space<vmem>>, vector<16x128xf32>,
    return
  }
  func.func @transform_0(%arg0: i32) -> (i32, i32) {
    %c0_i32 = arith.constant 0 : i32
    %c0_i32_0 = arith.constant 0 : i32
    return %arg0, %c0_i32 : i32, i32
  }
  func.func @transform_1(%arg0: i32) -> (i32, i32) {
    %c0_i32 = arith.constant 0 : i32
    %c0_i32_0 = arith.constant 0 : i32
    %c0_i32_1 = arith.constant 0 : i32
    return %c0_i32, %c0_i32_0 : i32, i32
  }
  func.func @transform_2(%arg0: i32) -> (i32, i32) {
    %c0_i32 = arith.constant 0 : i32
    %c0_i32_0 = arith.constant 0 : i32
    %c0_i32_1 = arith.constant 0 : i32
    return %c0_i32, %c0_i32_0 : i32, i32
  }
  func.func @transform_3(%arg0: i32) -> (i32, i32) {
    %c0_i32 = arith.constant 0 : i32
    %c0_i32_0 = arith.constant 0 : i32
    %c0_i32_1 = arith.constant 0 : i32
    return %c0_i32, %c0_i32_0 : i32, i32
  }
  func.func @transform_4(%arg0: i32) -> (i32, i32) {
    %c0_i32 = arith.constant 0 : i32
    %c0_i32_0 = arith.constant 0 : i32
    %c0_i32_1 = arith.constant 0 : i32
    return %c0_i32, %c0_i32_0 : i32, i32
  }
  func.func @transform_5(%arg0: i32) -> (i32, i32) {
    %c0_i32 = arith.constant 0 : i32
    %c0_i32_0 = arith.constant 0 : i32
    %c0_i32_1 = arith.constant 0 : i32
    return %c0_i32, %c0_i32_0 : i32, i32
  }
  func.func @transform_6(%arg0: i32) -> (i32, i32) {
    %c0_i32 = arith.constant 0 : i32
    %c0_i32_0 = arith.constant 0 : i32
    %c0_i32_1 = arith.constant 0 : i32
    return %c0_i32, %c0_i32_0 : i32, i32
  }
  func.func @transform_7(%arg0: i32) -> (i32, i32) {
    %c0_i32 = arith.constant 0 : i32
    %c0_i32_0 = arith.constant 0 : i32
    return %arg0, %c0_i32 : i32, i32
  }
}

</mosaic_0001>

<llo_original>
// kernel: eleva_forward.1
$region0: #{eleva_forward.1}
  #allocation0 [shape = 'u32[]', space=smem, size = 0x4, offset = 0x4, fixed_abs, tag = 'smem constant byte address 0x4 - core index']
  #allocation1 [shape = 'u32[72,128]{1,0:T(1,128)}', space=vmem, size = 0x9000, scoped, tag = 'internal scratch']
  %s0 = inlined_call_operand.vmem [shape: bf16[16,512], index: 0, kind: input, shape index: {}]
  %s1 = inlined_call_operand.hbm [shape: bf16[512,512], index: 1, kind: input, shape index: {}]
  %s2 = inlined_call_operand.vmem [shape: f32[1,512], index: 2, kind: input, shape index: {}]
  %s3 = inlined_call_operand.hbm [shape: bf16[512,128], index: 3, kind: input, shape index: {}]
  %s4 = inlined_call_operand.vmem [shape: f32[1,128], index: 4, kind: input, shape index: {}]
  %s5 = inlined_call_operand.vmem [shape: bf16[128,128], index: 5, kind: input, shape index: {}]
  %s6 = inlined_call_operand.vmem [shape: f32[1,128], index: 6, kind: input, shape index: {}]
  %s7 = inlined_call_operand.vmem [shape: f32[16,128], index: 7, kind: output, shape index: {}]
  %s8 = sld [smem:[#allocation0]]
  $region46: #{eleva_forward.1} parent=0
    _
  %s10 = ssub.s32 1, %s8
  %s11 = scalar_select 0, %s10, %s8
  $region1: #{eleva_forward.1} parent=0
    #allocation2 [shape = 'u8[524288]{0}', space=vmem, size = 0x80000, scoped, tag = 'input window, operand 1, single buffered']
    #allocation3 [shape = 's32[1]{0}', space=sflag, size = 0x4, scoped, tag = 'scoped memory for eleva_forward.1']
    #allocation4 [shape = 'u8[131072]{0}', space=vmem, size = 0x20000, scoped, tag = 'input window, operand 3, single buffered']
    #allocation5 [shape = 's32[1]{0}', space=sflag, size = 0x4, scoped, tag = 'scoped memory for eleva_forward.1']
    %12 = vsyncpa [#allocation3], 0
    %13 = vsyncpa [#allocation5], 0
    // Predicated region
    $region2: #{eleva_forward.1} parent=1 // pred_check
      _
    $region3: #{eleva_forward.1} parent=1 // pred_check_branch
      %15 = sbr.rel (0) target = $region5
    $region4: #{eleva_forward.1} parent=1 // pred_region
      _
    $region5: #{eleva_forward.1} parent=1 // pred_fallthru
      _
    // Predicated region
    $region6: #{eleva_forward.1} parent=1 // pred_check
      _
    $region7: #{eleva_forward.1} parent=1 // pred_check_branch
      %17 = sbr.rel (0) target = $region9
    $region8: #{eleva_forward.1} parent=1 // pred_region
      %19 = vsyncadd [#allocation3], 0
      %s20 = sshll.u32 %s1, 4
      %s21 = int_to_ptr.hbm [resolvable:$true] %s20
      %s22 = sshll.u32 [#allocation2], 4
      %s23 = int_to_ptr.vmem [resolvable:$true] %s22
      %28 = dma.hbm_to_vmem [thread:$0]  %s21, 16384, %s23, [#allocation3], 256, 256, 16
    $region9: #{eleva_forward.1} parent=1 // pred_fallthru
      _
    // Predicated region
    $region10: #{eleva_forward.1} parent=1 // pred_check
      _
    $region11: #{eleva_forward.1} parent=1 // pred_check_branch
      %30 = sbr.rel (0) target = $region13
    $region12: #{eleva_forward.1} parent=1 // pred_region
      _
    $region13: #{eleva_forward.1} parent=1 // pred_fallthru
      _
    // Predicated region
    $region14: #{eleva_forward.1} parent=1 // pred_check
      _
    $region15: #{eleva_forward.1} parent=1 // pred_check_branch
      %32 = sbr.rel (0) target = $region17
    $region16: #{eleva_forward.1} parent=1 // pred_region
      %34 = vsyncadd [#allocation5], 0
      %s35 = sshll.u32 %s3, 4
      %s36 = int_to_ptr.hbm [resolvable:$true] %s35
      %s37 = sshll.u32 [#allocation4], 4
      %s38 = int_to_ptr.vmem [resolvable:$true] %s37
      %43 = dma.hbm_to_vmem [thread:$0]  %s36, 4096, %s38, [#allocation5], 64, 64, 4
    $region17: #{eleva_forward.1} parent=1 // pred_fallthru
      _
    // Predicated region
    $region18: #{eleva_forward.1} parent=1 // pred_check
      _
    $region19: #{eleva_forward.1} parent=1 // pred_check_branch
      %45 = sbr.rel (0) target = $region21
    $region20: #{eleva_forward.1} parent=1 // pred_region
      _
    $region21: #{eleva_forward.1} parent=1 // pred_fallthru
      _
    // Predicated region
    $region22: #{eleva_forward.1} parent=1 // pred_check
      _
    $region23: #{eleva_forward.1} parent=1 // pred_check_branch
      %47 = sbr.rel (0) target = $region25
    $region24: #{eleva_forward.1} parent=1 // pred_region
      _
    $region25: #{eleva_forward.1} parent=1 // pred_fallthru
      _
    // Predicated region
    $region26: #{eleva_forward.1} parent=1 // pred_check
      _
    $region27: #{eleva_forward.1} parent=1 // pred_check_branch
      %49 = sbr.rel (0) target = $region29
    $region28: #{eleva_forward.1} parent=1 // pred_region
      _
    $region29: #{eleva_forward.1} parent=1 // pred_fallthru
      _
    // Predicated region
    $region30: #{eleva_forward.1} parent=1 // pred_check
      _
    $region31: #{eleva_forward.1} parent=1 // pred_check_branch
      %51 = sbr.rel (0) target = $region33
    $region32: #{eleva_forward.1} parent=1 // pred_region
      %53 = dma.done [#allocation3], 16384
    $region33: #{eleva_forward.1} parent=1 // pred_fallthru
      _
    // Predicated region
    $region34: #{eleva_forward.1} parent=1 // pred_check
      _
    $region35: #{eleva_forward.1} parent=1 // pred_check_branch
      %55 = sbr.rel (0) target = $region37
    $region36: #{eleva_forward.1} parent=1 // pred_region
      %57 = dma.done [#allocation5], 4096
    $region37: #{eleva_forward.1} parent=1 // pred_fallthru
      _
    %v58 = vld [vmem:[%s0] sm:$0xff]
    %v59 = vld [vmem:[%s0 + $0x8] sm:$0xff]
    %v60 = vld [vmem:[%s0 + $0x10] sm:$0xff]
    %v61 = vld [vmem:[%s0 + $0x18] sm:$0xff]
    %v62 = vld [vmem:[#allocation2] sm:$0xff]
    %v63 = vld [vmem:[#allocation2 + $0x8] sm:$0xff]
    %v64 = vld [vmem:[#allocation2 + $0x10] sm:$0xff]
    %v65 = vld [vmem:[#allocation2 + $0x18] sm:$0xff]
    %v66 = vld [vmem:[#allocation2 + $0x20] sm:$0xff]
    %v67 = vld [vmem:[#allocation2 + $0x28] sm:$0xff]
    %v68 = vld [vmem:[#allocation2 + $0x30] sm:$0xff]
    %v69 = vld [vmem:[#allocation2 + $0x38] sm:$0xff]
    %v70 = vld [vmem:[#allocation2 + $0x40] sm:$0xff]
    %v71 = vld [vmem:[#allocation2 + $0x48] sm:$0xff]
    %v72 = vld [vmem:[#allocation2 + $0x50] sm:$0xff]
    %v73 = vld [vmem:[#allocation2 + $0x58] sm:$0xff]
    %v74 = vld [vmem:[#allocation2 + $0x60] sm:$0xff]
    %v75 = vld [vmem:[#allocation2 + $0x68] sm:$0xff]
    %v76 = vld [vmem:[#allocation2 + $0x70] sm:$0xff]
    %v77 = vld [vmem:[#allocation2 + $0x78] sm:$0xff]
    %v78 = vld [vmem:[#allocation2 + $0x80] sm:$0xff]
    %v79 = vld [vmem:[#allocation2 + $0x88] sm:$0xff]
    %v80 = vld [vmem:[#allocation2 + $0x90] sm:$0xff]
    %v81 = vld [vmem:[#allocation2 + $0x98] sm:$0xff]
    %v82 = vld [vmem:[#allocation2 + $0xa0] sm:$0xff]
    %v83 = vld [vmem:[#allocation2 + $0xa8] sm:$0xff]
    %v84 = vld [vmem:[#allocation2 + $0xb0] sm:$0xff]
    %v85 = vld [vmem:[#allocation2 + $0xb8] sm:$0xff]
    %v86 = vld [vmem:[#allocation2 + $0xc0] sm:$0xff]
    %v87 = vld [vmem:[#allocation2 + $0xc8] sm:$0xff]
    %v88 = vld [vmem:[#allocation2 + $0xd0] sm:$0xff]
    %v89 = vld [vmem:[#allocation2 + $0xd8] sm:$0xff]
    %v90 = vld [vmem:[#allocation2 + $0xe0] sm:$0xff]
    %v91 = vld [vmem:[#allocation2 + $0xe8] sm:$0xff]
    %v92 = vld [vmem:[#allocation2 + $0xf0] sm:$0xff]
    %v93 = vld [vmem:[#allocation2 + $0xf8] sm:$0xff]
    %v94 = vld [vmem:[#allocation2 + $0x100] sm:$0xff]
    %v95 = vld [vmem:[#allocation2 + $0x108] sm:$0xff]
    %v96 = vld [vmem:[#allocation2 + $0x110] sm:$0xff]
    %v97 = vld [vmem:[#allocation2 + $0x118] sm:$0xff]
    %v98 = vld [vmem:[#allocation2 + $0x120] sm:$0xff]
    %v99 = vld [vmem:[#allocation2 + $0x128] sm:$0xff]
    %v100 = vld [vmem:[#allocation2 + $0x130] sm:$0xff]
    %v101 = vld [vmem:[#allocation2 + $0x138] sm:$0xff]
    %v102 = vld [vmem:[#allocation2 + $0x140] sm:$0xff]
    %v103 = vld [vmem:[#allocation2 + $0x148] sm:$0xff]
    %v104 = vld [vmem:[#allocation2 + $0x150] sm:$0xff]
    %v105 = vld [vmem:[#allocation2 + $0x158] sm:$0xff]
    %v106 = vld [vmem:[#allocation2 + $0x160] sm:$0xff]
    %v107 = vld [vmem:[#allocation2 + $0x168] sm:$0xff]
    %v108 = vld [vmem:[#allocation2 + $0x170] sm:$0xff]
    %v109 = vld [vmem:[#allocation2 + $0x178] sm:$0xff]
    %v110 = vld [vmem:[#allocation2 + $0x180] sm:$0xff]
    %v111 = vld [vmem:[#allocation2 + $0x188] sm:$0xff]
    %v112 = vld [vmem:[#allocation2 + $0x190] sm:$0xff]
    %v113 = vld [vmem:[#allocation2 + $0x198] sm:$0xff]
    %v114 = vld [vmem:[#allocation2 + $0x1a0] sm:$0xff]
    %v115 = vld [vmem:[#allocation2 + $0x1a8] sm:$0xff]
    %v116 = vld [vmem:[#allocation2 + $0x1b0] sm:$0xff]
    %v117 = vld [vmem:[#allocation2 + $0x1b8] sm:$0xff]
    %v118 = vld [vmem:[#allocation2 + $0x1c0] sm:$0xff]
    %v119 = vld [vmem:[#allocation2 + $0x1c8] sm:$0xff]
    %v120 = vld [vmem:[#allocation2 + $0x1d0] sm:$0xff]
    %v121 = vld [vmem:[#allocation2 + $0x1d8] sm:$0xff]
    %v122 = vld [vmem:[#allocation2 + $0x1e0] sm:$0xff]
    %v123 = vld [vmem:[#allocation2 + $0x1e8] sm:$0xff]
    %v124 = vld [vmem:[#allocation2 + $0x1f0] sm:$0xff]
    %v125 = vld [vmem:[#allocation2 + $0x1f8] sm:$0xff]
    %v126 = vld [vmem:[#allocation2 + $0x200] sm:$0xff]
    %v127 = vld [vmem:[#allocation2 + $0x208] sm:$0xff]
    %v128 = vld [vmem:[#allocation2 + $0x210] sm:$0xff]
    %v129 = vld [vmem:[#allocation2 + $0x218] sm:$0xff]
    %v130 = vld [vmem:[#allocation2 + $0x220] sm:$0xff]
    %v131 = vld [vmem:[#allocation2 + $0x228] sm:$0xff]
    %v132 = vld [vmem:[#allocation2 + $0x230] sm:$0xff]
    %v133 = vld [vmem:[#allocation2 + $0x238] sm:$0xff]
    %v134 = vld [vmem:[#allocation2 + $0x240] sm:$0xff]
    %v135 = vld [vmem:[#allocation2 + $0x248] sm:$0xff]
    %v136 = vld [vmem:[#allocation2 + $0x250] sm:$0xff]
    %v137 = vld [vmem:[#allocation2 + $0x258] sm:$0xff]
    %v138 = vld [vmem:[#allocation2 + $0x260] sm:$0xff]
    %v139 = vld [vmem:[#allocation2 + $0x268] sm:$0xff]
    %v140 = vld [vmem:[#allocation2 + $0x270] sm:$0xff]
    %v141 = vld [vmem:[#allocation2 + $0x278] sm:$0xff]
    %v142 = vld [vmem:[#allocation2 + $0x280] sm:$0xff]
    %v143 = vld [vmem:[#allocation2 + $0x288] sm:$0xff]
    %v144 = vld [vmem:[#allocation2 + $0x290] sm:$0xff]
    %v145 = vld [vmem:[#allocation2 + $0x298] sm:$0xff]
    %v146 = vld [vmem:[#allocation2 + $0x2a0] sm:$0xff]
    %v147 = vld [vmem:[#allocation2 + $0x2a8] sm:$0xff]
    %v148 = vld [vmem:[#allocation2 + $0x2b0] sm:$0xff]
    %v149 = vld [vmem:[#allocation2 + $0x2b8] sm:$0xff]
    %v150 = vld [vmem:[#allocation2 + $0x2c0] sm:$0xff]
    %v151 = vld [vmem:[#allocation2 + $0x2c8] sm:$0xff]
    %v152 = vld [vmem:[#allocation2 + $0x2d0] sm:$0xff]
    %v153 = vld [vmem:[#allocation2 + $0x2d8] sm:$0xff]
    %v154 = vld [vmem:[#allocation2 + $0x2e0] sm:$0xff]
    %v155 = vld [vmem:[#allocation2 + $0x2e8] sm:$0xff]
    %v156 = vld [vmem:[#allocation2 + $0x2f0] sm:$0xff]
    %v157 = vld [vmem:[#allocation2 + $0x2f8] sm:$0xff]
    %v158 = vld [vmem:[#allocation2 + $0x300] sm:$0xff]
    %v159 = vld [vmem:[#allocation2 + $0x308] sm:$0xff]
    %v160 = vld [vmem:[#allocation2 + $0x310] sm:$0xff]
    %v161 = vld [vmem:[#allocation2 + $0x318] sm:$0xff]
    %v162 = vld [vmem:[#allocation2 + $0x320] sm:$0xff]
    %v163 = vld [vmem:[#allocation2 + $0x328] sm:$0xff]
    %v164 = vld [vmem:[#allocation2 + $0x330] sm:$0xff]
    %v165 = vld [vmem:[#allocation2 + $0x338] sm:$0xff]
    %v166 = vld [vmem:[#allocation2 + $0x340] sm:$0xff]
    %v167 = vld [vmem:[#allocation2 + $0x348] sm:$0xff]
    %v168 = vld [vmem:[#allocation2 + $0x350] sm:$0xff]
    %v169 = vld [vmem:[#allocation2 + $0x358] sm:$0xff]
    %v170 = vld [vmem:[#allocation2 + $0x360] sm:$0xff]
    %v171 = vld [vmem:[#allocation2 + $0x368] sm:$0xff]
    %v172 = vld [vmem:[#allocation2 + $0x370] sm:$0xff]
    %v173 = vld [vmem:[#allocation2 + $0x378] sm:$0xff]
    %v174 = vld [vmem:[#allocation2 + $0x380] sm:$0xff]
    %v175 = vld [vmem:[#allocation2 + $0x388] sm:$0xff]
    %v176 = vld [vmem:[#allocation2 + $0x390] sm:$0xff]
    %v177 = vld [vmem:[#allocation2 + $0x398] sm:$0xff]
    %v178 = vld [vmem:[#allocation2 + $0x3a0] sm:$0xff]
    %v179 = vld [vmem:[#allocation2 + $0x3a8] sm:$0xff]
    %v180 = vld [vmem:[#allocation2 + $0x3b0] sm:$0xff]
    %v181 = vld [vmem:[#allocation2 + $0x3b8] sm:$0xff]
    %v182 = vld [vmem:[#allocation2 + $0x3c0] sm:$0xff]
    %v183 = vld [vmem:[#allocation2 + $0x3c8] sm:$0xff]
    %v184 = vld [vmem:[#allocation2 + $0x3d0] sm:$0xff]
    %v185 = vld [vmem:[#allocation2 + $0x3d8] sm:$0xff]
    %v186 = vld [vmem:[#allocation2 + $0x3e0] sm:$0xff]
    %v187 = vld [vmem:[#allocation2 + $0x3e8] sm:$0xff]
    %v188 = vld [vmem:[#allocation2 + $0x3f0] sm:$0xff]
    %v189 = vld [vmem:[#allocation2 + $0x3f8] sm:$0xff]
    %v190 = vld [vmem:[%s2] sm:$0xf]
    %v192 = vperm.slane %v190, 0
    %v193 = vperm.slane %v190, 1
    %v194 = vperm.slane %v190, 2
    %v195 = vperm.slane %v190, 3
    %v204 = vunpack.c.l.b16 %v58
    %v205 = vunpack.c.h.b16 %v58
    %v206 = vunpack.c.l.b16 %v59
    %v207 = vunpack.c.h.b16 %v59
    %v208 = vunpack.c.l.b16 %v60
    %v209 = vunpack.c.h.b16 %v60
    %v210 = vunpack.c.l.b16 %v61
    %v211 = vunpack.c.h.b16 %v61
    %v212 = vpack.c.b16 %v208, %v204
    %v213 = vpack.c.b16 %v209, %v205
    %v214 = vpack.c.b16 %v210, %v206
    %v215 = vpack.c.b16 %v211, %v207
    %v348 = vunpack.c.l.b16 %v62
    %v349 = vunpack.c.h.b16 %v62
    %v350 = vunpack.c.l.b16 %v63
    %v351 = vunpack.c.h.b16 %v63
    %v352 = vunpack.c.l.b16 %v64
    %v353 = vunpack.c.h.b16 %v64
    %v354 = vunpack.c.l.b16 %v65
    %v355 = vunpack.c.h.b16 %v65
    %v356 = vunpack.c.l.b16 %v66
    %v357 = vunpack.c.h.b16 %v66
    %v358 = vunpack.c.l.b16 %v67
    %v359 = vunpack.c.h.b16 %v67
    %v360 = vunpack.c.l.b16 %v68
    %v361 = vunpack.c.h.b16 %v68
    %v362 = vunpack.c.l.b16 %v69
    %v363 = vunpack.c.h.b16 %v69
    %v364 = vunpack.c.l.b16 %v70
    %v365 = vunpack.c.h.b16 %v70
    %v366 = vunpack.c.l.b16 %v71
    %v367 = vunpack.c.h.b16 %v71
    %v368 = vunpack.c.l.b16 %v72
    %v369 = vunpack.c.h.b16 %v72
    %v370 = vunpack.c.l.b16 %v73
    %v371 = vunpack.c.h.b16 %v73
    %v372 = vunpack.c.l.b16 %v74
    %v373 = vunpack.c.h.b16 %v74
    %v374 = vunpack.c.l.b16 %v75
    %v375 = vunpack.c.h.b16 %v75
    %v376 = vunpack.c.l.b16 %v76
    %v377 = vunpack.c.h.b16 %v76
    %v378 = vunpack.c.l.b16 %v77
    %v379 = vunpack.c.h.b16 %v77
    %v380 = vunpack.c.l.b16 %v78
    %v381 = vunpack.c.h.b16 %v78
    %v382 = vunpack.c.l.b16 %v79
    %v383 = vunpack.c.h.b16 %v79
    %v384 = vunpack.c.l.b16 %v80
    %v385 = vunpack.c.h.b16 %v80
    %v386 = vunpack.c.l.b16 %v81
    %v387 = vunpack.c.h.b16 %v81
    %v388 = vunpack.c.l.b16 %v82
    %v389 = vunpack.c.h.b16 %v82
    %v390 = vunpack.c.l.b16 %v83
    %v391 = vunpack.c.h.b16 %v83
    %v392 = vunpack.c.l.b16 %v84
    %v393 = vunpack.c.h.b16 %v84
    %v394 = vunpack.c.l.b16 %v85
    %v395 = vunpack.c.h.b16 %v85
    %v396 = vunpack.c.l.b16 %v86
    %v397 = vunpack.c.h.b16 %v86
    %v398 = vunpack.c.l.b16 %v87
    %v399 = vunpack.c.h.b16 %v87
    %v400 = vunpack.c.l.b16 %v88
    %v401 = vunpack.c.h.b16 %v88
    %v402 = vunpack.c.l.b16 %v89
    %v403 = vunpack.c.h.b16 %v89
    %v404 = vunpack.c.l.b16 %v90
    %v405 = vunpack.c.h.b16 %v90
    %v406 = vunpack.c.l.b16 %v91
    %v407 = vunpack.c.h.b16 %v91
    %v408 = vunpack.c.l.b16 %v92
    %v409 = vunpack.c.h.b16 %v92
    %v410 = vunpack.c.l.b16 %v93
    %v411 = vunpack.c.h.b16 %v93
    %v412 = vunpack.c.l.b16 %v94
    %v413 = vunpack.c.h.b16 %v94
    %v414 = vunpack.c.l.b16 %v95
    %v415 = vunpack.c.h.b16 %v95
    %v416 = vunpack.c.l.b16 %v96
    %v417 = vunpack.c.h.b16 %v96
    %v418 = vunpack.c.l.b16 %v97
    %v419 = vunpack.c.h.b16 %v97
    %v420 = vunpack.c.l.b16 %v98
    %v421 = vunpack.c.h.b16 %v98
    %v422 = vunpack.c.l.b16 %v99
    %v423 = vunpack.c.h.b16 %v99
    %v424 = vunpack.c.l.b16 %v100
    %v425 = vunpack.c.h.b16 %v100
    %v426 = vunpack.c.l.b16 %v101
    %v427 = vunpack.c.h.b16 %v101
    %v428 = vunpack.c.l.b16 %v102
    %v429 = vunpack.c.h.b16 %v102
    %v430 = vunpack.c.l.b16 %v103
    %v431 = vunpack.c.h.b16 %v103
    %v432 = vunpack.c.l.b16 %v104
    %v433 = vunpack.c.h.b16 %v104
    %v434 = vunpack.c.l.b16 %v105
    %v435 = vunpack.c.h.b16 %v105
    %v436 = vunpack.c.l.b16 %v106
    %v437 = vunpack.c.h.b16 %v106
    %v438 = vunpack.c.l.b16 %v107
    %v439 = vunpack.c.h.b16 %v107
    %v440 = vunpack.c.l.b16 %v108
    %v441 = vunpack.c.h.b16 %v108
    %v442 = vunpack.c.l.b16 %v109
    %v443 = vunpack.c.h.b16 %v109
    %v444 = vunpack.c.l.b16 %v110
    %v445 = vunpack.c.h.b16 %v110
    %v446 = vunpack.c.l.b16 %v111
    %v447 = vunpack.c.h.b16 %v111
    %v448 = vunpack.c.l.b16 %v112
    %v449 = vunpack.c.h.b16 %v112
    %v450 = vunpack.c.l.b16 %v113
    %v451 = vunpack.c.h.b16 %v113
    %v452 = vunpack.c.l.b16 %v114
    %v453 = vunpack.c.h.b16 %v114
    %v454 = vunpack.c.l.b16 %v115
    %v455 = vunpack.c.h.b16 %v115
    %v456 = vunpack.c.l.b16 %v116
    %v457 = vunpack.c.h.b16 %v116
    %v458 = vunpack.c.l.b16 %v117
    %v459 = vunpack.c.h.b16 %v117
    %v460 = vunpack.c.l.b16 %v118
    %v461 = vunpack.c.h.b16 %v118
    %v462 = vunpack.c.l.b16 %v119
    %v463 = vunpack.c.h.b16 %v119
    %v464 = vunpack.c.l.b16 %v120
    %v465 = vunpack.c.h.b16 %v120
    %v466 = vunpack.c.l.b16 %v121
    %v467 = vunpack.c.h.b16 %v121
    %v468 = vunpack.c.l.b16 %v122
    %v469 = vunpack.c.h.b16 %v122
    %v470 = vunpack.c.l.b16 %v123
    %v471 = vunpack.c.h.b16 %v123
    %v472 = vunpack.c.l.b16 %v124
    %v473 = vunpack.c.h.b16 %v124
    %v474 = vunpack.c.l.b16 %v125
    %v475 = vunpack.c.h.b16 %v125
    %v476 = vunpack.c.l.b16 %v126
    %v477 = vunpack.c.h.b16 %v126
    %v478 = vunpack.c.l.b16 %v127
    %v479 = vunpack.c.h.b16 %v127
    %v480 = vunpack.c.l.b16 %v128
    %v481 = vunpack.c.h.b16 %v128
    %v482 = vunpack.c.l.b16 %v129
    %v483 = vunpack.c.h.b16 %v129
    %v484 = vunpack.c.l.b16 %v130
    %v485 = vunpack.c.h.b16 %v130
    %v486 = vunpack.c.l.b16 %v131
    %v487 = vunpack.c.h.b16 %v131
    %v488 = vunpack.c.l.b16 %v132
    %v489 = vunpack.c.h.b16 %v132
    %v490 = vunpack.c.l.b16 %v133
    %v491 = vunpack.c.h.b16 %v133
    %v492 = vunpack.c.l.b16 %v134
    %v493 = vunpack.c.h.b16 %v134
    %v494 = vunpack.c.l.b16 %v135
    %v495 = vunpack.c.h.b16 %v135
    %v496 = vunpack.c.l.b16 %v136
    %v497 = vunpack.c.h.b16 %v136
    %v498 = vunpack.c.l.b16 %v137
    %v499 = vunpack.c.h.b16 %v137
    %v500 = vunpack.c.l.b16 %v138
    %v501 = vunpack.c.h.b16 %v138
    %v502 = vunpack.c.l.b16 %v139
    %v503 = vunpack.c.h.b16 %v139
    %v504 = vunpack.c.l.b16 %v140
    %v505 = vunpack.c.h.b16 %v140
    %v506 = vunpack.c.l.b16 %v141
    %v507 = vunpack.c.h.b16 %v141
    %v508 = vunpack.c.l.b16 %v142
    %v509 = vunpack.c.h.b16 %v142
    %v510 = vunpack.c.l.b16 %v143
    %v511 = vunpack.c.h.b16 %v143
    %v512 = vunpack.c.l.b16 %v144
    %v513 = vunpack.c.h.b16 %v144
    %v514 = vunpack.c.l.b16 %v145
    %v515 = vunpack.c.h.b16 %v145
    %v516 = vunpack.c.l.b16 %v146
    %v517 = vunpack.c.h.b16 %v146
    %v518 = vunpack.c.l.b16 %v147
    %v519 = vunpack.c.h.b16 %v147
    %v520 = vunpack.c.l.b16 %v148
    %v521 = vunpack.c.h.b16 %v148
    %v522 = vunpack.c.l.b16 %v149
    %v523 = vunpack.c.h.b16 %v149
    %v524 = vunpack.c.l.b16 %v150
    %v525 = vunpack.c.h.b16 %v150
    %v526 = vunpack.c.l.b16 %v151
    %v527 = vunpack.c.h.b16 %v151
    %v528 = vunpack.c.l.b16 %v152
    %v529 = vunpack.c.h.b16 %v152
    %v530 = vunpack.c.l.b16 %v153
    %v531 = vunpack.c.h.b16 %v153
    %v532 = vunpack.c.l.b16 %v154
    %v533 = vunpack.c.h.b16 %v154
    %v534 = vunpack.c.l.b16 %v155
    %v535 = vunpack.c.h.b16 %v155
    %v536 = vunpack.c.l.b16 %v156
    %v537 = vunpack.c.h.b16 %v156
    %v538 = vunpack.c.l.b16 %v157
    %v539 = vunpack.c.h.b16 %v157
    %v540 = vunpack.c.l.b16 %v158
    %v541 = vunpack.c.h.b16 %v158
    %v542 = vunpack.c.l.b16 %v159
    %v543 = vunpack.c.h.b16 %v159
    %v544 = vunpack.c.l.b16 %v160
    %v545 = vunpack.c.h.b16 %v160
    %v546 = vunpack.c.l.b16 %v161
    %v547 = vunpack.c.h.b16 %v161
    %v548 = vunpack.c.l.b16 %v162
    %v549 = vunpack.c.h.b16 %v162
    %v550 = vunpack.c.l.b16 %v163
    %v551 = vunpack.c.h.b16 %v163
    %v552 = vunpack.c.l.b16 %v164
    %v553 = vunpack.c.h.b16 %v164
    %v554 = vunpack.c.l.b16 %v165
    %v555 = vunpack.c.h.b16 %v165
    %v556 = vunpack.c.l.b16 %v166
    %v557 = vunpack.c.h.b16 %v166
    %v558 = vunpack.c.l.b16 %v167
    %v559 = vunpack.c.h.b16 %v167
    %v560 = vunpack.c.l.b16 %v168
    %v561 = vunpack.c.h.b16 %v168
    %v562 = vunpack.c.l.b16 %v169
    %v563 = vunpack.c.h.b16 %v169
    %v564 = vunpack.c.l.b16 %v170
    %v565 = vunpack.c.h.b16 %v170
    %v566 = vunpack.c.l.b16 %v171
    %v567 = vunpack.c.h.b16 %v171
    %v568 = vunpack.c.l.b16 %v172
    %v569 = vunpack.c.h.b16 %v172
    %v570 = vunpack.c.l.b16 %v173
    %v571 = vunpack.c.h.b16 %v173
    %v572 = vunpack.c.l.b16 %v174
    %v573 = vunpack.c.h.b16 %v174
    %v574 = vunpack.c.l.b16 %v175
    %v575 = vunpack.c.h.b16 %v175
    %v576 = vunpack.c.l.b16 %v176
    %v577 = vunpack.c.h.b16 %v176
    %v578 = vunpack.c.l.b16 %v177
    %v579 = vunpack.c.h.b16 %v177
    %v580 = vunpack.c.l.b16 %v178
    %v581 = vunpack.c.h.b16 %v178
    %v582 = vunpack.c.l.b16 %v179
    %v583 = vunpack.c.h.b16 %v179
    %v584 = vunpack.c.l.b16 %v180
    %v585 = vunpack.c.h.b16 %v180
    %v586 = vunpack.c.l.b16 %v181
    %v587 = vunpack.c.h.b16 %v181
    %v588 = vunpack.c.l.b16 %v182
    %v589 = vunpack.c.h.b16 %v182
    %v590 = vunpack.c.l.b16 %v183
    %v591 = vunpack.c.h.b16 %v183
    %v592 = vunpack.c.l.b16 %v184
    %v593 = vunpack.c.h.b16 %v184
    %v594 = vunpack.c.l.b16 %v185
    %v595 = vunpack.c.h.b16 %v185
    %v596 = vunpack.c.l.b16 %v186
    %v597 = vunpack.c.h.b16 %v186
    %v598 = vunpack.c.l.b16 %v187
    %v599 = vunpack.c.h.b16 %v187
    %v600 = vunpack.c.l.b16 %v188
    %v601 = vunpack.c.h.b16 %v188
    %v602 = vunpack.c.l.b16 %v189
    %v603 = vunpack.c.h.b16 %v189
    %v604 = vpack.c.b16 %v352, %v348
    %v605 = vpack.c.b16 %v353, %v349
    %v606 = vpack.c.b16 %v354, %v350
    %v607 = vpack.c.b16 %v355, %v351
    %v608 = vpack.c.b16 %v360, %v356
    %v609 = vpack.c.b16 %v361, %v357
    %v610 = vpack.c.b16 %v362, %v358
    %v611 = vpack.c.b16 %v363, %v359
    %v612 = vpack.c.b16 %v368, %v364
    %v613 = vpack.c.b16 %v369, %v365
    %v614 = vpack.c.b16 %v370, %v366
    %v615 = vpack.c.b16 %v371, %v367
    %v616 = vpack.c.b16 %v376, %v372
    %v617 = vpack.c.b16 %v377, %v373
    %v618 = vpack.c.b16 %v378, %v374
    %v619 = vpack.c.b16 %v379, %v375
    %v620 = vpack.c.b16 %v384, %v380
    %v621 = vpack.c.b16 %v385, %v381
    %v622 = vpack.c.b16 %v386, %v382
    %v623 = vpack.c.b16 %v387, %v383
    %v624 = vpack.c.b16 %v392, %v388
    %v625 = vpack.c.b16 %v393, %v389
    %v626 = vpack.c.b16 %v394, %v390
    %v627 = vpack.c.b16 %v395, %v391
    %v628 = vpack.c.b16 %v400, %v396
    %v629 = vpack.c.b16 %v401, %v397
    %v630 = vpack.c.b16 %v402, %v398
    %v631 = vpack.c.b16 %v403, %v399
    %v632 = vpack.c.b16 %v408, %v404
    %v633 = vpack.c.b16 %v409, %v405
    %v634 = vpack.c.b16 %v410, %v406
    %v635 = vpack.c.b16 %v411, %v407
    %v636 = vpack.c.b16 %v416, %v412
    %v637 = vpack.c.b16 %v417, %v413
    %v638 = vpack.c.b16 %v418, %v414
    %v639 = vpack.c.b16 %v419, %v415
    %v640 = vpack.c.b16 %v424, %v420
    %v641 = vpack.c.b16 %v425, %v421
    %v642 = vpack.c.b16 %v426, %v422
    %v643 = vpack.c.b16 %v427, %v423
    %v644 = vpack.c.b16 %v432, %v428
    %v645 = vpack.c.b16 %v433, %v429
    %v646 = vpack.c.b16 %v434, %v430
    %v647 = vpack.c.b16 %v435, %v431
    %v648 = vpack.c.b16 %v440, %v436
    %v649 = vpack.c.b16 %v441, %v437
    %v650 = vpack.c.b16 %v442, %v438
    %v651 = vpack.c.b16 %v443, %v439
    %v652 = vpack.c.b16 %v448, %v444
    %v653 = vpack.c.b16 %v449, %v445
    %v654 = vpack.c.b16 %v450, %v446
    %v655 = vpack.c.b16 %v451, %v447
    %v656 = vpack.c.b16 %v456, %v452
    %v657 = vpack.c.b16 %v457, %v453
    %v658 = vpack.c.b16 %v458, %v454
    %v659 = vpack.c.b16 %v459, %v455
    %v660 = vpack.c.b16 %v464, %v460
    %v661 = vpack.c.b16 %v465, %v461
    %v662 = vpack.c.b16 %v466, %v462
    %v663 = vpack.c.b16 %v467, %v463
    %v664 = vpack.c.b16 %v472, %v468
    %v665 = vpack.c.b16 %v473, %v469
    %v666 = vpack.c.b16 %v474, %v470
    %v667 = vpack.c.b16 %v475, %v471
    %v668 = vpack.c.b16 %v480, %v476
    %v669 = vpack.c.b16 %v481, %v477
    %v670 = vpack.c.b16 %v482, %v478
    %v671 = vpack.c.b16 %v483, %v479
    %v672 = vpack.c.b16 %v488, %v484
    %v673 = vpack.c.b16 %v489, %v485
    %v674 = vpack.c.b16 %v490, %v486
    %v675 = vpack.c.b16 %v491, %v487
    %v676 = vpack.c.b16 %v496, %v492
    %v677 = vpack.c.b16 %v497, %v493
    %v678 = vpack.c.b16 %v498, %v494
    %v679 = vpack.c.b16 %v499, %v495
    %v680 = vpack.c.b16 %v504, %v500
    %v681 = vpack.c.b16 %v505, %v501
    %v682 = vpack.c.b16 %v506, %v502
    %v683 = vpack.c.b16 %v507, %v503
    %v684 = vpack.c.b16 %v512, %v508
    %v685 = vpack.c.b16 %v513, %v509
    %v686 = vpack.c.b16 %v514, %v510
    %v687 = vpack.c.b16 %v515, %v511
    %v688 = vpack.c.b16 %v520, %v516
    %v689 = vpack.c.b16 %v521, %v517
    %v690 = vpack.c.b16 %v522, %v518
    %v691 = vpack.c.b16 %v523, %v519
    %v692 = vpack.c.b16 %v528, %v524
    %v693 = vpack.c.b16 %v529, %v525
    %v694 = vpack.c.b16 %v530, %v526
    %v695 = vpack.c.b16 %v531, %v527
    %v696 = vpack.c.b16 %v536, %v532
    %v697 = vpack.c.b16 %v537, %v533
    %v698 = vpack.c.b16 %v538, %v534
    %v699 = vpack.c.b16 %v539, %v535
    %v700 = vpack.c.b16 %v544, %v540
    %v701 = vpack.c.b16 %v545, %v541
    %v702 = vpack.c.b16 %v546, %v542
    %v703 = vpack.c.b16 %v547, %v543
    %v704 = vpack.c.b16 %v552, %v548
    %v705 = vpack.c.b16 %v553, %v549
    %v706 = vpack.c.b16 %v554, %v550
    %v707 = vpack.c.b16 %v555, %v551
    %v708 = vpack.c.b16 %v560, %v556
    %v709 = vpack.c.b16 %v561, %v557
    %v710 = vpack.c.b16 %v562, %v558
    %v711 = vpack.c.b16 %v563, %v559
    %v712 = vpack.c.b16 %v568, %v564
    %v713 = vpack.c.b16 %v569, %v565
    %v714 = vpack.c.b16 %v570, %v566
    %v715 = vpack.c.b16 %v571, %v567
    %v716 = vpack.c.b16 %v576, %v572
    %v717 = vpack.c.b16 %v577, %v573
    %v718 = vpack.c.b16 %v578, %v574
    %v719 = vpack.c.b16 %v579, %v575
    %v720 = vpack.c.b16 %v584, %v580
    %v721 = vpack.c.b16 %v585, %v581
    %v722 = vpack.c.b16 %v586, %v582
    %v723 = vpack.c.b16 %v587, %v583
    %v724 = vpack.c.b16 %v592, %v588
    %v725 = vpack.c.b16 %v593, %v589
    %v726 = vpack.c.b16 %v594, %v590
    %v727 = vpack.c.b16 %v595, %v591
    %v728 = vpack.c.b16 %v600, %v596
    %v729 = vpack.c.b16 %v601, %v597
    %v730 = vpack.c.b16 %v602, %v598
    %v731 = vpack.c.b16 %v603, %v599
    %860 = vmatpush.bf16.msra.mxu0 %v632
    %861 = vmatpush.bf16.msra.mxu0 %v628
    %862 = vmatpush.bf16.msra.mxu0 %v624
    %863 = vmatpush.bf16.msra.mxu0 %v620
    %864 = vmatpush.bf16.msra.mxu0 %v616
    %865 = vmatpush.bf16.msra.mxu0 %v612
    %866 = vmatpush.bf16.msra.mxu0 %v608
    %867 = vmatpush.bf16.msra.mxu0 %v604
    %868 = vmatmul.bf16.gmra.mxu0 %v212
    %v869 = vpop.f32.mrf.mxu0
    %v870 = vadd.f32 %v192, %v869
    %v871 = vpop.f32.mrf.mxu0
    %v872 = vadd.f32 %v192, %v871
    %873 = vdwg.mxu0
    %874 = vmatpush.bf16.msra.mxu0 %v664
    %875 = vmatpush.bf16.msra.mxu0 %v660
    %876 = vmatpush.bf16.msra.mxu0 %v656
    %877 = vmatpush.bf16.msra.mxu0 %v652
    %878 = vmatpush.bf16.msra.mxu0 %v648
    %879 = vmatpush.bf16.msra.mxu0 %v644
    %880 = vmatpush.bf16.msra.mxu0 %v640
    %881 = vmatpush.bf16.msra.mxu0 %v636
    %882 = vmatmul.bf16.gmra.mxu0 %v213
    %v883 = vpop.f32.mrf.mxu0
    %v884 = vadd.f32 %v870, %v883
    %v885 = vpop.f32.mrf.mxu0
    %v886 = vadd.f32 %v872, %v885
    %887 = vdwg.mxu0
    %888 = vmatpush.bf16.msra.mxu0 %v696
    %889 = vmatpush.bf16.msra.mxu0 %v692
    %890 = vmatpush.bf16.msra.mxu0 %v688
    %891 = vmatpush.bf16.msra.mxu0 %v684
    %892 = vmatpush.bf16.msra.mxu0 %v680
    %893 = vmatpush.bf16.msra.mxu0 %v676
    %894 = vmatpush.bf16.msra.mxu0 %v672
    %895 = vmatpush.bf16.msra.mxu0 %v668
    %896 = vmatmul.bf16.gmra.mxu0 %v214
    %v897 = vpop.f32.mrf.mxu0
    %v898 = vadd.f32 %v884, %v897
    %v899 = vpop.f32.mrf.mxu0
    %v900 = vadd.f32 %v886, %v899
    %901 = vdwg.mxu0
    %902 = vmatpush.bf16.msra.mxu0 %v728
    %903 = vmatpush.bf16.msra.mxu0 %v724
    %904 = vmatpush.bf16.msra.mxu0 %v720
    %905 = vmatpush.bf16.msra.mxu0 %v716
    %906 = vmatpush.bf16.msra.mxu0 %v712
    %907 = vmatpush.bf16.msra.mxu0 %v708
    %908 = vmatpush.bf16.msra.mxu0 %v704
    %909 = vmatpush.bf16.msra.mxu0 %v700
    %910 = vmatmul.bf16.gmra.mxu0 %v215
    %v911 = vpop.f32.mrf.mxu0
    %v912 = vadd.f32 %v898, %v911
    %v913 = vpop.f32.mrf.mxu0
    %v914 = vadd.f32 %v900, %v913
    %915 = vdwg.mxu0
    %916 = vmatpush.bf16.msra.mxu0 %v633
    %917 = vmatpush.bf16.msra.mxu0 %v629
    %918 = vmatpush.bf16.msra.mxu0 %v625
    %919 = vmatpush.bf16.msra.mxu0 %v621
    %920 = vmatpush.bf16.msra.mxu0 %v617
    %921 = vmatpush.bf16.msra.mxu0 %v613
    %922 = vmatpush.bf16.msra.mxu0 %v609
    %923 = vmatpush.bf16.msra.mxu0 %v605
    %924 = vmatmul.bf16.gmra.mxu0 %v212
    %v925 = vpop.f32.mrf.mxu0
    %v926 = vadd.f32 %v193, %v925
    %v927 = vpop.f32.mrf.mxu0
    %v928 = vadd.f32 %v193, %v927
    %929 = vdwg.mxu0
    %930 = vmatpush.bf16.msra.mxu0 %v665
    %931 = vmatpush.bf16.msra.mxu0 %v661
    %932 = vmatpush.bf16.msra.mxu0 %v657
    %933 = vmatpush.bf16.msra.mxu0 %v653
    %934 = vmatpush.bf16.msra.mxu0 %v649
    %935 = vmatpush.bf16.msra.mxu0 %v645
    %936 = vmatpush.bf16.msra.mxu0 %v641
    %937 = vmatpush.bf16.msra.mxu0 %v637
    %938 = vmatmul.bf16.gmra.mxu0 %v213
    %v939 = vpop.f32.mrf.mxu0
    %v940 = vadd.f32 %v926, %v939
    %v941 = vpop.f32.mrf.mxu0
    %v942 = vadd.f32 %v928, %v941
    %943 = vdwg.mxu0
    %944 = vmatpush.bf16.msra.mxu0 %v697
    %945 = vmatpush.bf16.msra.mxu0 %v693
    %946 = vmatpush.bf16.msra.mxu0 %v689
    %947 = vmatpush.bf16.msra.mxu0 %v685
    %948 = vmatpush.bf16.msra.mxu0 %v681
    %949 = vmatpush.bf16.msra.mxu0 %v677
    %950 = vmatpush.bf16.msra.mxu0 %v673
    %951 = vmatpush.bf16.msra.mxu0 %v669
    %952 = vmatmul.bf16.gmra.mxu0 %v214
    %v953 = vpop.f32.mrf.mxu0
    %v954 = vadd.f32 %v940, %v953
    %v955 = vpop.f32.mrf.mxu0
    %v956 = vadd.f32 %v942, %v955
    %957 = vdwg.mxu0
    %958 = vmatpush.bf16.msra.mxu0 %v729
    %959 = vmatpush.bf16.msra.mxu0 %v725
    %960 = vmatpush.bf16.msra.mxu0 %v721
    %961 = vmatpush.bf16.msra.mxu0 %v717
    %962 = vmatpush.bf16.msra.mxu0 %v713
    %963 = vmatpush.bf16.msra.mxu0 %v709
    %964 = vmatpush.bf16.msra.mxu0 %v705
    %965 = vmatpush.bf16.msra.mxu0 %v701
    %966 = vmatmul.bf16.gmra.mxu0 %v215
    %v967 = vpop.f32.mrf.mxu0
    %v968 = vadd.f32 %v954, %v967
    %v969 = vpop.f32.mrf.mxu0
    %v970 = vadd.f32 %v956, %v969
    %971 = vdwg.mxu0
    %972 = vmatpush.bf16.msra.mxu0 %v634
    %973 = vmatpush.bf16.msra.mxu0 %v630
    %974 = vmatpush.bf16.msra.mxu0 %v626
    %975 = vmatpush.bf16.msra.mxu0 %v622
    %976 = vmatpush.bf16.msra.mxu0 %v618
    %977 = vmatpush.bf16.msra.mxu0 %v614
    %978 = vmatpush.bf16.msra.mxu0 %v610
    %979 = vmatpush.bf16.msra.mxu0 %v606
    %980 = vmatmul.bf16.gmra.mxu0 %v212
    %v981 = vpop.f32.mrf.mxu0
    %v982 = vadd.f32 %v194, %v981
    %v983 = vpop.f32.mrf.mxu0
    %v984 = vadd.f32 %v194, %v983
    %985 = vdwg.mxu0
    %986 = vmatpush.bf16.msra.mxu0 %v666
    %987 = vmatpush.bf16.msra.mxu0 %v662
    %988 = vmatpush.bf16.msra.mxu0 %v658
    %989 = vmatpush.bf16.msra.mxu0 %v654
    %990 = vmatpush.bf16.msra.mxu0 %v650
    %991 = vmatpush.bf16.msra.mxu0 %v646
    %992 = vmatpush.bf16.msra.mxu0 %v642
    %993 = vmatpush.bf16.msra.mxu0 %v638
    %994 = vmatmul.bf16.gmra.mxu0 %v213
    %v995 = vpop.f32.mrf.mxu0
    %v996 = vadd.f32 %v982, %v995
    %v997 = vpop.f32.mrf.mxu0
    %v998 = vadd.f32 %v984, %v997
    %999 = vdwg.mxu0
    %1000 = vmatpush.bf16.msra.mxu0 %v698
    %1001 = vmatpush.bf16.msra.mxu0 %v694
    %1002 = vmatpush.bf16.msra.mxu0 %v690
    %1003 = vmatpush.bf16.msra.mxu0 %v686
    %1004 = vmatpush.bf16.msra.mxu0 %v682
    %1005 = vmatpush.bf16.msra.mxu0 %v678
    %1006 = vmatpush.bf16.msra.mxu0 %v674
    %1007 = vmatpush.bf16.msra.mxu0 %v670
    %1008 = vmatmul.bf16.gmra.mxu0 %v214
    %v1009 = vpop.f32.mrf.mxu0
    %v1010 = vadd.f32 %v996, %v1009
    %v1011 = vpop.f32.mrf.mxu0
    %v1012 = vadd.f32 %v998, %v1011
    %1013 = vdwg.mxu0
    %1014 = vmatpush.bf16.msra.mxu0 %v730
    %1015 = vmatpush.bf16.msra.mxu0 %v726
    %1016 = vmatpush.bf16.msra.mxu0 %v722
    %1017 = vmatpush.bf16.msra.mxu0 %v718
    %1018 = vmatpush.bf16.msra.mxu0 %v714
    %1019 = vmatpush.bf16.msra.mxu0 %v710
    %1020 = vmatpush.bf16.msra.mxu0 %v706
    %1021 = vmatpush.bf16.msra.mxu0 %v702
    %1022 = vmatmul.bf16.gmra.mxu0 %v215
    %v1023 = vpop.f32.mrf.mxu0
    %v1024 = vadd.f32 %v1010, %v1023
    %v1025 = vpop.f32.mrf.mxu0
    %v1026 = vadd.f32 %v1012, %v1025
    %1027 = vdwg.mxu0
    %1028 = vmatpush.bf16.msra.mxu0 %v635
    %1029 = vmatpush.bf16.msra.mxu0 %v631
    %1030 = vmatpush.bf16.msra.mxu0 %v627
    %1031 = vmatpush.bf16.msra.mxu0 %v623
    %1032 = vmatpush.bf16.msra.mxu0 %v619
    %1033 = vmatpush.bf16.msra.mxu0 %v615
    %1034 = vmatpush.bf16.msra.mxu0 %v611
    %1035 = vmatpush.bf16.msra.mxu0 %v607
    %1036 = vmatmul.bf16.gmra.mxu0 %v212
    %v1037 = vpop.f32.mrf.mxu0
    %v1038 = vadd.f32 %v195, %v1037
    %v1039 = vpop.f32.mrf.mxu0
    %v1040 = vadd.f32 %v195, %v1039
    %1041 = vdwg.mxu0
    %1042 = vmatpush.bf16.msra.mxu0 %v667
    %1043 = vmatpush.bf16.msra.mxu0 %v663
    %1044 = vmatpush.bf16.msra.mxu0 %v659
    %1045 = vmatpush.bf16.msra.mxu0 %v655
    %1046 = vmatpush.bf16.msra.mxu0 %v651
    %1047 = vmatpush.bf16.msra.mxu0 %v647
    %1048 = vmatpush.bf16.msra.mxu0 %v643
    %1049 = vmatpush.bf16.msra.mxu0 %v639
    %1050 = vmatmul.bf16.gmra.mxu0 %v213
    %v1051 = vpop.f32.mrf.mxu0
    %v1052 = vadd.f32 %v1038, %v1051
    %v1053 = vpop.f32.mrf.mxu0
    %v1054 = vadd.f32 %v1040, %v1053
    %1055 = vdwg.mxu0
    %1056 = vmatpush.bf16.msra.mxu0 %v699
    %1057 = vmatpush.bf16.msra.mxu0 %v695
    %1058 = vmatpush.bf16.msra.mxu0 %v691
    %1059 = vmatpush.bf16.msra.mxu0 %v687
    %1060 = vmatpush.bf16.msra.mxu0 %v683
    %1061 = vmatpush.bf16.msra.mxu0 %v679
    %1062 = vmatpush.bf16.msra.mxu0 %v675
    %1063 = vmatpush.bf16.msra.mxu0 %v671
    %1064 = vmatmul.bf16.gmra.mxu0 %v214
    %v1065 = vpop.f32.mrf.mxu0
    %v1066 = vadd.f32 %v1052, %v1065
    %v1067 = vpop.f32.mrf.mxu0
    %v1068 = vadd.f32 %v1054, %v1067
    %1069 = vdwg.mxu0
    %1070 = vmatpush.bf16.msra.mxu0 %v731
    %1071 = vmatpush.bf16.msra.mxu0 %v727
    %1072 = vmatpush.bf16.msra.mxu0 %v723
    %1073 = vmatpush.bf16.msra.mxu0 %v719
    %1074 = vmatpush.bf16.msra.mxu0 %v715
    %1075 = vmatpush.bf16.msra.mxu0 %v711
    %1076 = vmatpush.bf16.msra.mxu0 %v707
    %1077 = vmatpush.bf16.msra.mxu0 %v703
    %1078 = vmatmul.bf16.gmra.mxu0 %v215
    %v1079 = vpop.f32.mrf.mxu0
    %v1080 = vadd.f32 %v1066, %v1079
    %v1081 = vpop.f32.mrf.mxu0
    %v1082 = vadd.f32 %v1068, %v1081
    %1083 = vdwg.mxu0
    %v1084 = vmul.f32 %v912, 0.01
    %v1085 = vmul.f32 %v968, 0.01
    %v1086 = vmul.f32 %v1024, 0.01
    %v1087 = vmul.f32 %v1080, 0.01
    %v1088 = vmul.f32 %v914, 0.01
    %v1089 = vmul.f32 %v970, 0.01
    %v1090 = vmul.f32 %v1026, 0.01
    %v1091 = vmul.f32 %v1082, 0.01
    %v1092 = vmax.f32 %v912, %v1084
    %v1093 = vmax.f32 %v968, %v1085
    %v1094 = vmax.f32 %v1024, %v1086
    %v1095 = vmax.f32 %v1080, %v1087
    %v1096 = vmax.f32 %v914, %v1088
    %v1097 = vmax.f32 %v970, %v1089
    %v1098 = vmax.f32 %v1026, %v1090
    %v1099 = vmax.f32 %v1082, %v1091
    %v1100 = vpack.c.bf16 %v1096, %v1092
    %v1101 = vpack.c.bf16 %v1097, %v1093
    %v1102 = vpack.c.bf16 %v1098, %v1094
    %v1103 = vpack.c.bf16 %v1099, %v1095
    %v1104 = vld [vmem:[#allocation4] sm:$0xf]
    %v1105 = vld [vmem:[#allocation4 + $0x4] sm:$0xf]
    %v1106 = vld [vmem:[#allocation4 + $0x8] sm:$0xf]
    %v1107 = vld [vmem:[#allocation4 + $0xc] sm:$0xf]
    %v1108 = vld [vmem:[#allocation4 + $0x10] sm:$0xf]
    %v1109 = vld [vmem:[#allocation4 + $0x14] sm:$0xf]
    %v1110 = vld [vmem:[#allocation4 + $0x18] sm:$0xf]
    %v1111 = vld [vmem:[#allocation4 + $0x1c] sm:$0xf]
    %v1112 = vld [vmem:[#allocation4 + $0x20] sm:$0xf]
    %v1113 = vld [vmem:[#allocation4 + $0x24] sm:$0xf]
    %v1114 = vld [vmem:[#allocation4 + $0x28] sm:$0xf]
    %v1115 = vld [vmem:[#allocation4 + $0x2c] sm:$0xf]
    %v1116 = vld [vmem:[#allocation4 + $0x30] sm:$0xf]
    %v1117 = vld [vmem:[#allocation4 + $0x34] sm:$0xf]
    %v1118 = vld [vmem:[#allocation4 + $0x38] sm:$0xf]
    %v1119 = vld [vmem:[#allocation4 + $0x3c] sm:$0xf]
    %v1120 = vld [vmem:[#allocation4 + $0x40] sm:$0xf]
    %v1121 = vld [vmem:[#allocation4 + $0x44] sm:$0xf]
    %v1122 = vld [vmem:[#allocation4 + $0x48] sm:$0xf]
    %v1123 = vld [vmem:[#allocation4 + $0x4c] sm:$0xf]
    %v1124 = vld [vmem:[#allocation4 + $0x50] sm:$0xf]
    %v1125 = vld [vmem:[#allocation4 + $0x54] sm:$0xf]
    %v1126 = vld [vmem:[#allocation4 + $0x58] sm:$0xf]
    %v1127 = vld [vmem:[#allocation4 + $0x5c] sm:$0xf]
    %v1128 = vld [vmem:[#allocation4 + $0x60] sm:$0xf]
    %v1129 = vld [vmem:[#allocation4 + $0x64] sm:$0xf]
    %v1130 = vld [vmem:[#allocation4 + $0x68] sm:$0xf]
    %v1131 = vld [vmem:[#allocation4 + $0x6c] sm:$0xf]
    %v1132 = vld [vmem:[#allocation4 + $0x70] sm:$0xf]
    %v1133 = vld [vmem:[#allocation4 + $0x74] sm:$0xf]
    %v1134 = vld [vmem:[#allocation4 + $0x78] sm:$0xf]
    %v1135 = vld [vmem:[#allocation4 + $0x7c] sm:$0xf]
    %v1136 = vld [vmem:[#allocation4 + $0x80] sm:$0xf]
    %v1137 = vld [vmem:[#allocation4 + $0x84] sm:$0xf]
    %v1138 = vld [vmem:[#allocation4 + $0x88] sm:$0xf]
    %v1139 = vld [vmem:[#allocation4 + $0x8c] sm:$0xf]
    %v1140 = vld [vmem:[#allocation4 + $0x90] sm:$0xf]
    %v1141 = vld [vmem:[#allocation4 + $0x94] sm:$0xf]
    %v1142 = vld [vmem:[#allocation4 + $0x98] sm:$0xf]
    %v1143 = vld [vmem:[#allocation4 + $0x9c] sm:$0xf]
    %v1144 = vld [vmem:[#allocation4 + $0xa0] sm:$0xf]
    %v1145 = vld [vmem:[#allocation4 + $0xa4] sm:$0xf]
    %v1146 = vld [vmem:[#allocation4 + $0xa8] sm:$0xf]
    %v1147 = vld [vmem:[#allocation4 + $0xac] sm:$0xf]
    %v1148 = vld [vmem:[#allocation4 + $0xb0] sm:$0xf]
    %v1149 = vld [vmem:[#allocation4 + $0xb4] sm:$0xf]
    %v1150 = vld [vmem:[#allocation4 + $0xb8] sm:$0xf]
    %v1151 = vld [vmem:[#allocation4 + $0xbc] sm:$0xf]
    %v1152 = vld [vmem:[#allocation4 + $0xc0] sm:$0xf]
    %v1153 = vld [vmem:[#allocation4 + $0xc4] sm:$0xf]
    %v1154 = vld [vmem:[#allocation4 + $0xc8] sm:$0xf]
    %v1155 = vld [vmem:[#allocation4 + $0xcc] sm:$0xf]
    %v1156 = vld [vmem:[#allocation4 + $0xd0] sm:$0xf]
    %v1157 = vld [vmem:[#allocation4 + $0xd4] sm:$0xf]
    %v1158 = vld [vmem:[#allocation4 + $0xd8] sm:$0xf]
    %v1159 = vld [vmem:[#allocation4 + $0xdc] sm:$0xf]
    %v1160 = vld [vmem:[#allocation4 + $0xe0] sm:$0xf]
    %v1161 = vld [vmem:[#allocation4 + $0xe4] sm:$0xf]
    %v1162 = vld [vmem:[#allocation4 + $0xe8] sm:$0xf]
    %v1163 = vld [vmem:[#allocation4 + $0xec] sm:$0xf]
    %v1164 = vld [vmem:[#allocation4 + $0xf0] sm:$0xf]
    %v1165 = vld [vmem:[#allocation4 + $0xf4] sm:$0xf]
    %v1166 = vld [vmem:[#allocation4 + $0xf8] sm:$0xf]
    %v1167 = vld [vmem:[#allocation4 + $0xfc] sm:$0xf]
    %v1168 = vld [vmem:[%s4] sm:$0x1]
    %v1170 = vperm.slane %v1168, 0
    %v1236 = vunpack.c.l.b16 %v1104
    %v1237 = vunpack.c.l.b16 %v1105
    %v1238 = vunpack.c.l.b16 %v1106
    %v1239 = vunpack.c.l.b16 %v1107
    %v1240 = vunpack.c.l.b16 %v1108
    %v1241 = vunpack.c.l.b16 %v1109
    %v1242 = vunpack.c.l.b16 %v1110
    %v1243 = vunpack.c.l.b16 %v1111
    %v1244 = vunpack.c.l.b16 %v1112
    %v1245 = vunpack.c.l.b16 %v1113
    %v1246 = vunpack.c.l.b16 %v1114
    %v1247 = vunpack.c.l.b16 %v1115
    %v1248 = vunpack.c.l.b16 %v1116
    %v1249 = vunpack.c.l.b16 %v1117
    %v1250 = vunpack.c.l.b16 %v1118
    %v1251 = vunpack.c.l.b16 %v1119
    %v1252 = vunpack.c.l.b16 %v1120
    %v1253 = vunpack.c.l.b16 %v1121
    %v1254 = vunpack.c.l.b16 %v1122
    %v1255 = vunpack.c.l.b16 %v1123
    %v1256 = vunpack.c.l.b16 %v1124
    %v1257 = vunpack.c.l.b16 %v1125
    %v1258 = vunpack.c.l.b16 %v1126
    %v1259 = vunpack.c.l.b16 %v1127
    %v1260 = vunpack.c.l.b16 %v1128
    %v1261 = vunpack.c.l.b16 %v1129
    %v1262 = vunpack.c.l.b16 %v1130
    %v1263 = vunpack.c.l.b16 %v1131
    %v1264 = vunpack.c.l.b16 %v1132
    %v1265 = vunpack.c.l.b16 %v1133
    %v1266 = vunpack.c.l.b16 %v1134
    %v1267 = vunpack.c.l.b16 %v1135
    %v1268 = vunpack.c.l.b16 %v1136
    %v1269 = vunpack.c.l.b16 %v1137
    %v1270 = vunpack.c.l.b16 %v1138
    %v1271 = vunpack.c.l.b16 %v1139
    %v1272 = vunpack.c.l.b16 %v1140
    %v1273 = vunpack.c.l.b16 %v1141
    %v1274 = vunpack.c.l.b16 %v1142
    %v1275 = vunpack.c.l.b16 %v1143
    %v1276 = vunpack.c.l.b16 %v1144
    %v1277 = vunpack.c.l.b16 %v1145
    %v1278 = vunpack.c.l.b16 %v1146
    %v1279 = vunpack.c.l.b16 %v1147
    %v1280 = vunpack.c.l.b16 %v1148
    %v1281 = vunpack.c.l.b16 %v1149
    %v1282 = vunpack.c.l.b16 %v1150
    %v1283 = vunpack.c.l.b16 %v1151
    %v1284 = vunpack.c.l.b16 %v1152
    %v1285 = vunpack.c.l.b16 %v1153
    %v1286 = vunpack.c.l.b16 %v1154
    %v1287 = vunpack.c.l.b16 %v1155
    %v1288 = vunpack.c.l.b16 %v1156
    %v1289 = vunpack.c.l.b16 %v1157
    %v1290 = vunpack.c.l.b16 %v1158
    %v1291 = vunpack.c.l.b16 %v1159
    %v1292 = vunpack.c.l.b16 %v1160
    %v1293 = vunpack.c.l.b16 %v1161
    %v1294 = vunpack.c.l.b16 %v1162
    %v1295 = vunpack.c.l.b16 %v1163
    %v1296 = vunpack.c.l.b16 %v1164
    %v1297 = vunpack.c.l.b16 %v1165
    %v1298 = vunpack.c.l.b16 %v1166
    %v1299 = vunpack.c.l.b16 %v1167
    %v1300 = vpack.c.b16 %v1237, %v1236
    %v1301 = vpack.c.b16 %v1239, %v1238
    %v1302 = vpack.c.b16 %v1241, %v1240
    %v1303 = vpack.c.b16 %v1243, %v1242
    %v1304 = vpack.c.b16 %v1245, %v1244
    %v1305 = vpack.c.b16 %v1247, %v1246
    %v1306 = vpack.c.b16 %v1249, %v1248
    %v1307 = vpack.c.b16 %v1251, %v1250
    %v1308 = vpack.c.b16 %v1253, %v1252
    %v1309 = vpack.c.b16 %v1255, %v1254
    %v1310 = vpack.c.b16 %v1257, %v1256
    %v1311 = vpack.c.b16 %v1259, %v1258
    %v1312 = vpack.c.b16 %v1261, %v1260
    %v1313 = vpack.c.b16 %v1263, %v1262
    %v1314 = vpack.c.b16 %v1265, %v1264
    %v1315 = vpack.c.b16 %v1267, %v1266
    %v1316 = vpack.c.b16 %v1269, %v1268
    %v1317 = vpack.c.b16 %v1271, %v1270
    %v1318 = vpack.c.b16 %v1273, %v1272
    %v1319 = vpack.c.b16 %v1275, %v1274
    %v1320 = vpack.c.b16 %v1277, %v1276
    %v1321 = vpack.c.b16 %v1279, %v1278
    %v1322 = vpack.c.b16 %v1281, %v1280
    %v1323 = vpack.c.b16 %v1283, %v1282
    %v1324 = vpack.c.b16 %v1285, %v1284
    %v1325 = vpack.c.b16 %v1287, %v1286
    %v1326 = vpack.c.b16 %v1289, %v1288
    %v1327 = vpack.c.b16 %v1291, %v1290
    %v1328 = vpack.c.b16 %v1293, %v1292
    %v1329 = vpack.c.b16 %v1295, %v1294
    %v1330 = vpack.c.b16 %v1297, %v1296
    %v1331 = vpack.c.b16 %v1299, %v1298
    %1364 = vmatpush.bf16.msra.mxu0 %v1307
    %1365 = vmatpush.bf16.msra.mxu0 %v1306
    %1366 = vmatpush.bf16.msra.mxu0 %v1305
    %1367 = vmatpush.bf16.msra.mxu0 %v1304
    %1368 = vmatpush.bf16.msra.mxu0 %v1303
    %1369 = vmatpush.bf16.msra.mxu0 %v1302
    %1370 = vmatpush.bf16.msra.mxu0 %v1301
    %1371 = vmatpush.bf16.msra.mxu0 %v1300
    %1372 = vmatmul.bf16.gmra.mxu0 %v1100
    %v1373 = vpop.f32.mrf.mxu0
    %v1374 = vadd.f32 %v1170, %v1373
    %v1375 = vpop.f32.mrf.mxu0
    %v1376 = vadd.f32 %v1170, %v1375
    %1377 = vdwg.mxu0
    %1378 = vmatpush.bf16.msra.mxu0 %v1315
    %1379 = vmatpush.bf16.msra.mxu0 %v1314
    %1380 = vmatpush.bf16.msra.mxu0 %v1313
    %1381 = vmatpush.bf16.msra.mxu0 %v1312
    %1382 = vmatpush.bf16.msra.mxu0 %v1311
    %1383 = vmatpush.bf16.msra.mxu0 %v1310
    %1384 = vmatpush.bf16.msra.mxu0 %v1309
    %1385 = vmatpush.bf16.msra.mxu0 %v1308
    %1386 = vmatmul.bf16.gmra.mxu0 %v1101
    %v1387 = vpop.f32.mrf.mxu0
    %v1388 = vadd.f32 %v1374, %v1387
    %v1389 = vpop.f32.mrf.mxu0
    %v1390 = vadd.f32 %v1376, %v1389
    %1391 = vdwg.mxu0
    %1392 = vmatpush.bf16.msra.mxu0 %v1323
    %1393 = vmatpush.bf16.msra.mxu0 %v1322
    %1394 = vmatpush.bf16.msra.mxu0 %v1321
    %1395 = vmatpush.bf16.msra.mxu0 %v1320
    %1396 = vmatpush.bf16.msra.mxu0 %v1319
    %1397 = vmatpush.bf16.msra.mxu0 %v1318
    %1398 = vmatpush.bf16.msra.mxu0 %v1317
    %1399 = vmatpush.bf16.msra.mxu0 %v1316
    %1400 = vmatmul.bf16.gmra.mxu0 %v1102
    %v1401 = vpop.f32.mrf.mxu0
    %v1402 = vadd.f32 %v1388, %v1401
    %v1403 = vpop.f32.mrf.mxu0
    %v1404 = vadd.f32 %v1390, %v1403
    %1405 = vdwg.mxu0
    %1406 = vmatpush.bf16.msra.mxu0 %v1331
    %1407 = vmatpush.bf16.msra.mxu0 %v1330
    %1408 = vmatpush.bf16.msra.mxu0 %v1329
    %1409 = vmatpush.bf16.msra.mxu0 %v1328
    %1410 = vmatpush.bf16.msra.mxu0 %v1327
    %1411 = vmatpush.bf16.msra.mxu0 %v1326
    %1412 = vmatpush.bf16.msra.mxu0 %v1325
    %1413 = vmatpush.bf16.msra.mxu0 %v1324
    %1414 = vmatmul.bf16.gmra.mxu0 %v1103
    %v1415 = vpop.f32.mrf.mxu0
    %v1416 = vadd.f32 %v1402, %v1415
    %v1417 = vpop.f32.mrf.mxu0
    %v1418 = vadd.f32 %v1404, %v1417
    %1419 = vdwg.mxu0
    %v1420 = vmul.f32 %v1416, 0.01
    %v1421 = vmul.f32 %v1418, 0.01
    %v1422 = vmax.f32 %v1416, %v1420
    %v1423 = vmax.f32 %v1418, %v1421
    %v1424 = vpack.c.bf16 %v1423, %v1422
    %v1425 = vld [vmem:[%s5] sm:$0xf]
    %v1426 = vld [vmem:[%s5 + $0x4] sm:$0xf]
    %v1427 = vld [vmem:[%s5 + $0x8] sm:$0xf]
    %v1428 = vld [vmem:[%s5 + $0xc] sm:$0xf]
    %v1429 = vld [vmem:[%s5 + $0x10] sm:$0xf]
    %v1430 = vld [vmem:[%s5 + $0x14] sm:$0xf]
    %v1431 = vld [vmem:[%s5 + $0x18] sm:$0xf]
    %v1432 = vld [vmem:[%s5 + $0x1c] sm:$0xf]
    %v1433 = vld [vmem:[%s5 + $0x20] sm:$0xf]
    %v1434 = vld [vmem:[%s5 + $0x24] sm:$0xf]
    %v1435 = vld [vmem:[%s5 + $0x28] sm:$0xf]
    %v1436 = vld [vmem:[%s5 + $0x2c] sm:$0xf]
    %v1437 = vld [vmem:[%s5 + $0x30] sm:$0xf]
    %v1438 = vld [vmem:[%s5 + $0x34] sm:$0xf]
    %v1439 = vld [vmem:[%s5 + $0x38] sm:$0xf]
    %v1440 = vld [vmem:[%s5 + $0x3c] sm:$0xf]
    %v1441 = vld [vmem:[%s6] sm:$0x1]
    %v1443 = vperm.slane %v1441, 0
    %v1461 = vunpack.c.l.b16 %v1425
    %v1462 = vunpack.c.l.b16 %v1426
    %v1463 = vunpack.c.l.b16 %v1427
    %v1464 = vunpack.c.l.b16 %v1428
    %v1465 = vunpack.c.l.b16 %v1429
    %v1466 = vunpack.c.l.b16 %v1430
    %v1467 = vunpack.c.l.b16 %v1431
    %v1468 = vunpack.c.l.b16 %v1432
    %v1469 = vunpack.c.l.b16 %v1433
    %v1470 = vunpack.c.l.b16 %v1434
    %v1471 = vunpack.c.l.b16 %v1435
    %v1472 = vunpack.c.l.b16 %v1436
    %v1473 = vunpack.c.l.b16 %v1437
    %v1474 = vunpack.c.l.b16 %v1438
    %v1475 = vunpack.c.l.b16 %v1439
    %v1476 = vunpack.c.l.b16 %v1440
    %v1477 = vpack.c.b16 %v1462, %v1461
    %v1478 = vpack.c.b16 %v1464, %v1463
    %v1479 = vpack.c.b16 %v1466, %v1465
    %v1480 = vpack.c.b16 %v1468, %v1467
    %v1481 = vpack.c.b16 %v1470, %v1469
    %v1482 = vpack.c.b16 %v1472, %v1471
    %v1483 = vpack.c.b16 %v1474, %v1473
    %v1484 = vpack.c.b16 %v1476, %v1475
    %1493 = vmatpush.bf16.msra.mxu0 %v1484
    %1494 = vmatpush.bf16.msra.mxu0 %v1483
    %1495 = vmatpush.bf16.msra.mxu0 %v1482
    %1496 = vmatpush.bf16.msra.mxu0 %v1481
    %1497 = vmatpush.bf16.msra.mxu0 %v1480
    %1498 = vmatpush.bf16.msra.mxu0 %v1479
    %1499 = vmatpush.bf16.msra.mxu0 %v1478
    %1500 = vmatpush.bf16.msra.mxu0 %v1477
    %1501 = vmatmul.bf16.gmra.mxu0 %v1424
    %v1502 = vpop.f32.mrf.mxu0
    %v1503 = vadd.f32 %v1443, %v1502
    %v1504 = vpop.f32.mrf.mxu0
    %v1505 = vadd.f32 %v1443, %v1504
    %1506 = vdwg.mxu0
    %v1507 = vlaneseq
    %v1508 = vand.u32 %v1507, 127
    %vm1509 = vcmp.lt.s32.totalorder %v1508, 2
    %v1510 = vsel %vm1509, %v1503, -1e+30
    %v1511 = vsel %vm1509, %v1505, -1e+30
    %1512 = vmax.xlane.f32.xlu0 %v1510
    %v1513 = vpop.xlane.xlu0 %1512
    %1514 = vmax.xlane.f32.xlu0 %v1511
    %v1515 = vpop.xlane.xlu0 %1514
    %v1516 = vsub.f32 %v1503, %v1513
    %v1517 = vsub.f32 %v1505, %v1515
    %v1518 = vmul.f32 %v1516, 1.442695
    %v1519 = vpow.pop %v1518
    %v1520 = vmul.f32 %v1517, 1.442695
    %v1521 = vpow.pop %v1520
    %v1522 = vsel %vm1509, %v1519, 0.0
    %v1523 = vsel %vm1509, %v1521, 0.0
    %1524 = vadd.xlane.f32.xlu0 %v1522
    %v1525 = vpop.xlane.xlu0 %1524
    %1526 = vadd.xlane.f32.xlu0 %v1523
    %v1527 = vpop.xlane.xlu0 %1526
    %v1528 = vlog2.pop %v1525
    %v1529 = vmul.f32 %v1528, 0.6931472
    %v1530 = vlog2.pop %v1527
    %v1531 = vmul.f32 %v1530, 0.6931472
    %v1532 = vsub.f32 %v1516, %v1529
    %v1533 = vsub.f32 %v1517, %v1531
    %1534 = vst [vmem:[%s7] sm:$0xff] %v1532
    %1535 = vst [vmem:[%s7 + $0x8] sm:$0xff] %v1533
    // Predicated region
    $region38: #{eleva_forward.1} parent=1 // pred_check
      _
    $region39: #{eleva_forward.1} parent=1 // pred_check_branch
      %1537 = sbr.rel (0) target = $region41
    $region40: #{eleva_forward.1} parent=1 // pred_region
      _
    $region41: #{eleva_forward.1} parent=1 // pred_fallthru
      _
    // Predicated region
    $region42: #{eleva_forward.1} parent=1 // pred_check
      _
    $region43: #{eleva_forward.1} parent=1 // pred_check_branch
      %1539 = sbr.rel (0) target = $region45
    $region44: #{eleva_forward.1} parent=1 // pred_region
      _
    $region45: #{eleva_forward.1} parent=1 // pred_fallthru
      _
    %1540 = vsyncpa [#allocation3], 1
    %1541 = vsyncpa [#allocation5], 1

</llo_original>
